<compile_context>
chip_gen: v5e
topology: v5e:2x2
jax: 0.10.0
libtpu: 0.0.40
codegen_flags: <defaults>
</compile_context>

<pallas_src>
import jax
import jax.numpy as jnp
from jax.experimental import pallas as pl
from jax.experimental.pallas import tpu as pltpu


LANES = 128              # batch maps to the 128-lane axis
MIN_PALLAS_BATCH = 2048  # below this, XLA's fused affine wins on fixed cost


def _round_up(a, m):
    return -(-a // m) * m


def fused_affine_kernel(p_ref, x_ref, o_ref):
    """y[n, :, :] = b[n] + sum_k W[k, n] * x[k, :, :]   (feature-major layout).

    p_ref : SMEM (K*N + N,) f32   = [W_fused row-major (K,N) ; b_fused (N,)]
    x_ref : VMEM (K, tr, 128)     batch on (sublanes, lanes)  -> dense vregs
    o_ref : VMEM (N, tr, 128)
    """
    K = x_ref.shape[0]
    N = o_ref.shape[0]
    # Load each feature plane once (dense (tr,128) vregs), reuse across the N outputs.
    xs = [x_ref[k] for k in range(K)]
    for n in range(N):
        # scalar (SMEM) x vector FMAs on the VALU; bias folded into the first term.
        acc = xs[0] * p_ref[n] + p_ref[K * N + n]
        for k in range(1, K):
            acc = acc + xs[k] * p_ref[k * N + n]
        o_ref[n] = acc.astype(o_ref.dtype)


def _fused_affine(x_fm, params, n_out):
    """Apply the fused affine map to feature-major x_fm (K, R, 128)."""
    K, R, L = x_fm.shape
    N = n_out

    # Tile the R (sublane-row) axis: cap at 512 rows (= 64K batch rows,
    # ~4 MiB double-buffered in+out) but always produce >=2 grid steps so the
    # two v7x TensorCores both get work (harmless no-op on v5e/v6e).
    tr = min(512, _round_up(-(-R // 2), 8))
    grid = (pl.cdiv(R, tr),)

    itemsize = jnp.dtype(x_fm.dtype).itemsize
    b_total = R * L
    cost = pl.CostEstimate(
        flops=2 * b_total * K * N + b_total * N,
        transcendentals=0,
        bytes_accessed=itemsize * b_total * (K + N)
        + params.size * jnp.dtype(params.dtype).itemsize,
    )

    return pl.pallas_call(
        fused_affine_kernel,
        out_shape=jax.ShapeDtypeStruct((N, R, L), x_fm.dtype),
        grid=grid,
        in_specs=[
            # 20 fused parameters: whole array in SMEM, resident across the grid.
            pl.BlockSpec(memory_space=pltpu.MemorySpace.SMEM),
            pl.BlockSpec((K, tr, L), lambda i: (0, i, 0)),
        ],
        out_specs=pl.BlockSpec((N, tr, L), lambda i: (0, i, 0)),
        compiler_params=pltpu.CompilerParams(
            dimension_semantics=("parallel",),
            vmem_limit_bytes=32 * 1024 * 1024,  # safe on v5e/v6e/v7x; we use ~4 MiB
        ),
        cost_estimate=cost,
    )(params, x_fm)


def test_model_forward(x, w1, b1, w2, b2, *, use_pallas=None):
    """Forward pass of TestModel: l2(l1(x)), with the two linears fused."""
    # Exact fusion up to f32 re-association (~1e-7).
    w_fused = w1 @ w2                       # (3, 5)
    b_fused = (b1 @ w2 + b2).reshape(-1)    # (5,)

    B, K = x.shape
    N = w_fused.shape[1]

    if use_pallas is None:
        use_pallas = B >= MIN_PALLAS_BATCH
    if not use_pallas:
        # Small-batch fast path: let XLA fuse the single tiny affine.
        return x @ w_fused + b_fused

    # Pad batch to a multiple of 128 so it tiles onto lanes, then go
    # feature-major: batch spans (sublane-rows R, 128 lanes) -> dense DMAs/stores.
    Bp = _round_up(B, LANES)
    xp = jnp.pad(x, ((0, Bp - B), (0, 0))) if Bp != B else x
    # TODO(synk): ideally the upstream producer emits x feature-major so this
    # transpose does not cost an extra HBM pass outside the kernel.
    x_fm = xp.T.reshape(K, Bp // LANES, LANES)

    params = jnp.concatenate(
        [w_fused.reshape(-1), b_fused]
    ).astype(jnp.float32)                   # (K*N + N,) = (20,)

    y_fm = _fused_affine(x_fm, params, N)   # (N, R, 128)
    y = y_fm.reshape(N, Bp).T               # (Bp, N)
    return y[:B] if Bp != B else y


def init_params(key):
    # Deterministic init mimicking nn.Linear's uniform(-1/sqrt(fan_in), +...)
    k1, k2, k3, k4 = jax.random.split(key, 4)
    bound1 = 1.0 / (3 ** 0.5)
    bound2 = 1.0 / (4 ** 0.5)
    w1 = jax.random.uniform(k1, (3, 4), jnp.float32, -bound1, bound1)
    b1 = jax.random.uniform(k2, (1, 4), jnp.float32, -bound1, bound1)
    w2 = jax.random.uniform(k3, (4, 5), jnp.float32, -bound2, bound2)
    b2 = jax.random.uniform(k4, (1, 5), jnp.float32, -bound2, bound2)
    return w1, b1, w2, b2


if __name__ == "__main__":
    key = jax.random.PRNGKey(0)
    kx, kp = jax.random.split(key)
    w1, b1, w2, b2 = init_params(kp)

    # Batch large enough to exercise the Pallas (lane-dense, multi-step-grid)
    # path; still tiny in memory (4096 x 3 f32 = 48 KB).
    B = 4096
    x = jax.random.normal(kx, (B, 3), jnp.float32)
    out = jax.block_until_ready(test_model_forward(x, w1, b1, w2, b2))
    ref = (x @ w1 + b1) @ w2 + b2
    assert out.shape == (B, 5)
    assert jnp.allclose(out, ref, atol=1e-5, rtol=1e-5)

    # Small batch takes the XLA fast path (no Pallas fixed cost) — check it too.
    x_small = jax.random.normal(kx, (8, 3), jnp.float32)
    out_s = jax.block_until_ready(test_model_forward(x_small, w1, b1, w2, b2))
    ref_s = (x_small @ w1 + b1) @ w2 + b2
    assert out_s.shape == (8, 5)
    assert jnp.allclose(out_s, ref_s, atol=1e-5, rtol=1e-5)

    print("KERNEL_OK")
</pallas_src>

<mosaic_0001>
module attributes {stable_mosaic.version = 11 : i64} {
  func.func @fused_affine_kernel(%arg0: i32, %arg1: memref<20xf32, #tpu.memory_space<smem>>, %arg2: memref<3x16x128xf32, #tpu.memory_space<vmem>>, %arg3: memref<5x16x128xf32, #tpu.memory_space<vmem>>) attributes {dimension_semantics = [#tpu.dimension_semantics<parallel>], iteration_bounds = array<i64: 2>, scalar_prefetch = 0 : i64, scratch_operands = 0 : i64, tpu.core_type = #tpu.core_type<tc>, window_params = [{transform_indices = @transform_0, window_bounds = array<i64: 20>}, {transform_indices = @transform_1, window_bounds = array<i64: 3, 16, 128>}, {transform_indices = @transform_2, window_bounds = array<i64: 5, 16, 128>}]} {
    %c0 = arith.constant 0 : index
    %c0_0 = arith.constant 0 : index
    %c0_1 = arith.constant 0 : index
    %0 = vector.load %arg2[%c0, %c0_0, %c0_1] : memref<3x16x128xf32, #tpu.memory_space<vmem>>, vector<1x16x128xf32>
    %1 = vector.shape_cast %0 : vector<1x16x128xf32> to vector<16x128xf32>
    %c1 = arith.constant 1 : index
    %c0_2 = arith.constant 0 : index
    %c0_3 = arith.constant 0 : index
    %2 = vector.load %arg2[%c1, %c0_2, %c0_3] : memref<3x16x128xf32, #tpu.memory_space<vmem>>, vector<1x16x128xf32>
    %3 = vector.shape_cast %2 : vector<1x16x128xf32> to vector<16x128xf32>
    %c2 = arith.constant 2 : index
    %c0_4 = arith.constant 0 : index
    %c0_5 = arith.constant 0 : index
    %4 = vector.load %arg2[%c2, %c0_4, %c0_5] : memref<3x16x128xf32, #tpu.memory_space<vmem>>, vector<1x16x128xf32>
    %5 = vector.shape_cast %4 : vector<1x16x128xf32> to vector<16x128xf32>
    %c0_6 = arith.constant 0 : index
    %6 = memref.load %arg1[%c0_6] : memref<20xf32, #tpu.memory_space<smem>>
    %7 = vector.broadcast %6 : f32 to vector<16x128xf32>
    %8 = arith.mulf %1, %7 : vector<16x128xf32>
    %c15 = arith.constant 15 : index
    %9 = memref.load %arg1[%c15] : memref<20xf32, #tpu.memory_space<smem>>
    %10 = vector.broadcast %9 : f32 to vector<16x128xf32>
    %11 = arith.addf %8, %10 : vector<16x128xf32>
    %c5 = arith.constant 5 : index
    %12 = memref.load %arg1[%c5] : memref<20xf32, #tpu.memory_space<smem>>
    %13 = vector.broadcast %12 : f32 to vector<16x128xf32>
    %14 = arith.mulf %3, %13 : vector<16x128xf32>
    %15 = arith.addf %11, %14 : vector<16x128xf32>
    %c10 = arith.constant 10 : index
    %16 = memref.load %arg1[%c10] : memref<20xf32, #tpu.memory_space<smem>>
    %17 = vector.broadcast %16 : f32 to vector<16x128xf32>
    %18 = arith.mulf %5, %17 : vector<16x128xf32>
    %19 = arith.addf %15, %18 : vector<16x128xf32>
    %c0_7 = arith.constant 0 : index
    %c0_8 = arith.constant 0 : index
    %c0_9 = arith.constant 0 : index
    %20 = vector.load %arg3[%c0_7, %c0_8, %c0_9] : memref<5x16x128xf32, #tpu.memory_space<vmem>>, vector<1x16x128xf32>
    %21 = vector.shape_cast %20 : vector<1x16x128xf32> to vector<16x128xf32>
    %22 = vector.shape_cast %19 : vector<16x128xf32> to vector<1x16x128xf32>
    tpu.vector_store %arg3[%c0_7, %c0_8, %c0_9], %22 {strides = array<i32>} : memref<5x16x128xf32, #tpu.memory_space<vmem>>, vector<1x16x128xf32>,
    %c1_10 = arith.constant 1 : index
    %23 = memref.load %arg1[%c1_10] : memref<20xf32, #tpu.memory_space<smem>>
    %24 = vector.broadcast %23 : f32 to vector<16x128xf32>
    %25 = arith.mulf %1, %24 : vector<16x128xf32>
    %c16 = arith.constant 16 : index
    %26 = memref.load %arg1[%c16] : memref<20xf32, #tpu.memory_space<smem>>
    %27 = vector.broadcast %26 : f32 to vector<16x128xf32>
    %28 = arith.addf %25, %27 : vector<16x128xf32>
    %c6 = arith.constant 6 : index
    %29 = memref.load %arg1[%c6] : memref<20xf32, #tpu.memory_space<smem>>
    %30 = vector.broadcast %29 : f32 to vector<16x128xf32>
    %31 = arith.mulf %3, %30 : vector<16x128xf32>
    %32 = arith.addf %28, %31 : vector<16x128xf32>
    %c11 = arith.constant 11 : index
    %33 = memref.load %arg1[%c11] : memref<20xf32, #tpu.memory_space<smem>>
    %34 = vector.broadcast %33 : f32 to vector<16x128xf32>
    %35 = arith.mulf %5, %34 : vector<16x128xf32>
    %36 = arith.addf %32, %35 : vector<16x128xf32>
    %c1_11 = arith.constant 1 : index
    %c0_12 = arith.constant 0 : index
    %c0_13 = arith.constant 0 : index
    %37 = vector.load %arg3[%c1_11, %c0_12, %c0_13] : memref<5x16x128xf32, #tpu.memory_space<vmem>>, vector<1x16x128xf32>
    %38 = vector.shape_cast %37 : vector<1x16x128xf32> to vector<16x128xf32>
    %39 = vector.shape_cast %36 : vector<16x128xf32> to vector<1x16x128xf32>
    tpu.vector_store %arg3[%c1_11, %c0_12, %c0_13], %39 {strides = array<i32>} : memref<5x16x128xf32, #tpu.memory_space<vmem>>, vector<1x16x128xf32>,
    %c2_14 = arith.constant 2 : index
    %40 = memref.load %arg1[%c2_14] : memref<20xf32, #tpu.memory_space<smem>>
    %41 = vector.broadcast %40 : f32 to vector<16x128xf32>
    %42 = arith.mulf %1, %41 : vector<16x128xf32>
    %c17 = arith.constant 17 : index
    %43 = memref.load %arg1[%c17] : memref<20xf32, #tpu.memory_space<smem>>
    %44 = vector.broadcast %43 : f32 to vector<16x128xf32>
    %45 = arith.addf %42, %44 : vector<16x128xf32>
    %c7 = arith.constant 7 : index
    %46 = memref.load %arg1[%c7] : memref<20xf32, #tpu.memory_space<smem>>
    %47 = vector.broadcast %46 : f32 to vector<16x128xf32>
    %48 = arith.mulf %3, %47 : vector<16x128xf32>
    %49 = arith.addf %45, %48 : vector<16x128xf32>
    %c12 = arith.constant 12 : index
    %50 = memref.load %arg1[%c12] : memref<20xf32, #tpu.memory_space<smem>>
    %51 = vector.broadcast %50 : f32 to vector<16x128xf32>
    %52 = arith.mulf %5, %51 : vector<16x128xf32>
    %53 = arith.addf %49, %52 : vector<16x128xf32>
    %c2_15 = arith.constant 2 : index
    %c0_16 = arith.constant 0 : index
    %c0_17 = arith.constant 0 : index
    %54 = vector.load %arg3[%c2_15, %c0_16, %c0_17] : memref<5x16x128xf32, #tpu.memory_space<vmem>>, vector<1x16x128xf32>
    %55 = vector.shape_cast %54 : vector<1x16x128xf32> to vector<16x128xf32>
    %56 = vector.shape_cast %53 : vector<16x128xf32> to vector<1x16x128xf32>
    tpu.vector_store %arg3[%c2_15, %c0_16, %c0_17], %56 {strides = array<i32>} : memref<5x16x128xf32, #tpu.memory_space<vmem>>, vector<1x16x128xf32>,
    %c3 = arith.constant 3 : index
    %57 = memref.load %arg1[%c3] : memref<20xf32, #tpu.memory_space<smem>>
    %58 = vector.broadcast %57 : f32 to vector<16x128xf32>
    %59 = arith.mulf %1, %58 : vector<16x128xf32>
    %c18 = arith.constant 18 : index
    %60 = memref.load %arg1[%c18] : memref<20xf32, #tpu.memory_space<smem>>
    %61 = vector.broadcast %60 : f32 to vector<16x128xf32>
    %62 = arith.addf %59, %61 : vector<16x128xf32>
    %c8 = arith.constant 8 : index
    %63 = memref.load %arg1[%c8] : memref<20xf32, #tpu.memory_space<smem>>
    %64 = vector.broadcast %63 : f32 to vector<16x128xf32>
    %65 = arith.mulf %3, %64 : vector<16x128xf32>
    %66 = arith.addf %62, %65 : vector<16x128xf32>
    %c13 = arith.constant 13 : index
    %67 = memref.load %arg1[%c13] : memref<20xf32, #tpu.memory_space<smem>>
    %68 = vector.broadcast %67 : f32 to vector<16x128xf32>
    %69 = arith.mulf %5, %68 : vector<16x128xf32>
    %70 = arith.addf %66, %69 : vector<16x128xf32>
    %c3_18 = arith.constant 3 : index
    %c0_19 = arith.constant 0 : index
    %c0_20 = arith.constant 0 : index
    %71 = vector.load %arg3[%c3_18, %c0_19, %c0_20] : memref<5x16x128xf32, #tpu.memory_space<vmem>>, vector<1x16x128xf32>
    %72 = vector.shape_cast %71 : vector<1x16x128xf32> to vector<16x128xf32>
    %73 = vector.shape_cast %70 : vector<16x128xf32> to vector<1x16x128xf32>
    tpu.vector_store %arg3[%c3_18, %c0_19, %c0_20], %73 {strides = array<i32>} : memref<5x16x128xf32, #tpu.memory_space<vmem>>, vector<1x16x128xf32>,
    %c4 = arith.constant 4 : index
    %74 = memref.load %arg1[%c4] : memref<20xf32, #tpu.memory_space<smem>>
    %75 = vector.broadcast %74 : f32 to vector<16x128xf32>
    %76 = arith.mulf %1, %75 : vector<16x128xf32>
    %c19 = arith.constant 19 : index
    %77 = memref.load %arg1[%c19] : memref<20xf32, #tpu.memory_space<smem>>
    %78 = vector.broadcast %77 : f32 to vector<16x128xf32>
    %79 = arith.addf %76, %78 : vector<16x128xf32>
    %c9 = arith.constant 9 : index
    %80 = memref.load %arg1[%c9] : memref<20xf32, #tpu.memory_space<smem>>
    %81 = vector.broadcast %80 : f32 to vector<16x128xf32>
    %82 = arith.mulf %3, %81 : vector<16x128xf32>
    %83 = arith.addf %79, %82 : vector<16x128xf32>
    %c14 = arith.constant 14 : index
    %84 = memref.load %arg1[%c14] : memref<20xf32, #tpu.memory_space<smem>>
    %85 = vector.broadcast %84 : f32 to vector<16x128xf32>
    %86 = arith.mulf %5, %85 : vector<16x128xf32>
    %87 = arith.addf %83, %86 : vector<16x128xf32>
    %c4_21 = arith.constant 4 : index
    %c0_22 = arith.constant 0 : index
    %c0_23 = arith.constant 0 : index
    %88 = vector.load %arg3[%c4_21, %c0_22, %c0_23] : memref<5x16x128xf32, #tpu.memory_space<vmem>>, vector<1x16x128xf32>
    %89 = vector.shape_cast %88 : vector<1x16x128xf32> to vector<16x128xf32>
    %90 = vector.shape_cast %87 : vector<16x128xf32> to vector<1x16x128xf32>
    tpu.vector_store %arg3[%c4_21, %c0_22, %c0_23], %90 {strides = array<i32>} : memref<5x16x128xf32, #tpu.memory_space<vmem>>, vector<1x16x128xf32>,
    return
  }
  func.func @transform_0(%arg0: i32) -> i32 {
    %c0_i32 = arith.constant 0 : i32
    %c0_i32_0 = arith.constant 0 : i32
    return %c0_i32 : i32
  }
  func.func @transform_1(%arg0: i32) -> (i32, i32, i32) {
    %c0_i32 = arith.constant 0 : i32
    %c0_i32_0 = arith.constant 0 : i32
    %c0_i32_1 = arith.constant 0 : i32
    return %c0_i32, %arg0, %c0_i32_0 : i32, i32, i32
  }
  func.func @transform_2(%arg0: i32) -> (i32, i32, i32) {
    %c0_i32 = arith.constant 0 : i32
    %c0_i32_0 = arith.constant 0 : i32
    %c0_i32_1 = arith.constant 0 : i32
    return %c0_i32, %arg0, %c0_i32_0 : i32, i32, i32
  }
}

</mosaic_0001>

<llo_original>
// kernel: tpu_custom_call.1
$region0: #{tpu_custom_call.1}
  #allocation0 [shape = 'u32[]', space=smem, size = 0x4, offset = 0x4, fixed_abs, tag = 'smem constant byte address 0x4 - core index']
  #allocation1 [shape = 'u32[72,128]{1,0:T(1,128)}', space=vmem, size = 0x9000, scoped, tag = 'internal scratch']
  #allocation8 [shape = 's32[]', space=sflag, size = 0x4, offset = 0, fixed_abs, tag = 'sflag constant byte address 0x0 - dummy sync flag']
  #allocation10 [shape = 's32[]', space=sflag, size = 0x4, offset = 0, fixed_abs, tag = 'sflag constant byte address 0x0 - dummy sync flag']
  %s0 = inlined_call_operand.hbm [shape: f32[20], index: 0, kind: input, shape index: {}]
  %s1 = inlined_call_operand.hbm [shape: f32[3,32,128], index: 1, kind: input, shape index: {}]
  %s2 = inlined_call_operand.hbm [shape: f32[5,32,128], index: 2, kind: output, shape index: {}]
  %s3 = sld [smem:[#allocation0]]
  $region49: #{tpu_custom_call.1} parent=0
    _
  %s5 = ssub.s32 1, %s3
  %s6 = scalar_select 0, %s5, %s3
  $region1: #{tpu_custom_call.1} parent=0
    #allocation2 [shape = 'u8[512]{0}', space=smem, size = 0x200, scoped, tag = 'input window, operand 0, single buffered']
    #allocation3 [shape = 's32[2]{0}', space=sflag, size = 0x8, scoped, tag = 'scoped memory for tpu_custom_call.1']
    #allocation4 [shape = 's32[2]{0}', space=sflag, size = 0x8, scoped, tag = 'scoped memory for tpu_custom_call.1']
    #allocation5 [shape = 's32[2]{0}', space=sflag, size = 0x8, scoped, tag = 'scoped memory for tpu_custom_call.1']
    #allocation6 [shape = 'u8[49152]{0}', space=vmem, size = 0xc000, scoped, tag = 'input window, operand 1']
    #allocation7 [shape = 'u8[81920]{0}', space=vmem, size = 0x14000, scoped, tag = 'output window, operand 0']
    %7 = vsyncpa [#allocation5], 0
    %8 = vsyncpa [#allocation3], 0
    %s9 = scalar_lea.sflag [#allocation3], 1
    %10 = vsyncpa %s9, 0
    %11 = vsyncpa [#allocation4], 0
    %s12 = scalar_lea.sflag [#allocation4], 1
    %13 = vsyncpa %s12, 0
    loop: start=0, step=1, limit=4
    $region2: #{tpu_custom_call.1} parent=1 // loop_pre_header
      _
    $region3: #{tpu_custom_call.1} parent=1 // loop_header
      %s15 = sphi 0, %s19
      %p16 = scmp.ge.s32.totalorder %s15, 4
      %s23 = sphi 0, %s23
      %s25 = sphi 0, %s23
      %s26 = sphi 0, %s25
      %s40 = sphi 0, %s26
      %s46 = sphi 0, %s48
      %s49 = sphi 0, %s46
      %s50 = sphi 0, %s49
      %s66 = sphi 0, %s50
      %s72 = sphi 0, %s74
      %s75 = sphi 0, %s72
      %s76 = sphi 0, %s75
      %s92 = sphi 0, %s76
    $region4: #{tpu_custom_call.1} parent=1 // loop_header_branch
      %18 = sbr.rel (%p16) target = $region8
    $region5: #{tpu_custom_call.1} parent=1 // loop_body
      %s20 = ssub.s32 %s15, 1
      %s21 = ssub.s32 %s15, 2
      %s22 = sadd.s32 %s15, 1
      %s24 = sadd.s32 %s23, 1
      %p27 = scmp.eq.s32.totalorder %s15, 1
      %p28 = scmp.ne.s32.totalorder %s23, %s25
      %p29 = scmp.eq.s32.totalorder %s15, 0
      %p30 = por %p28, %p29
      %p31 = scmp.ne.s32.totalorder %s23, %s25
      %p32 = scmp.eq.s32.totalorder %s20, 1
      %p33 = por %p31, %p32
      %p34 = scmp.ne.s32.totalorder %s25, %s26
      %p35 = scmp.eq.s32.totalorder %s20, 0
      %p36 = por %p34, %p35
      %p37 = scmp.ne.s32.totalorder %s25, %s26
      %p38 = scmp.eq.s32.totalorder %s21, 1
      %p39 = por %p37, %p38
      %p41 = scmp.ne.s32.totalorder %s26, %s40
      %p42 = scmp.eq.s32.totalorder %s21, 0
      %p43 = por %p41, %p42
      %s44 = ssub.s32 %s15, %s22
      %p45 = scmp.eq.s32.totalorder %s44, 0
      %s47 = sadd.s32 %s46, 1
      %s48 = scalar_select %p45, %s46, %s47
      %p51 = pneg %p45
      %p52 = scmp.eq.s32.totalorder %s15, 1
      %p53 = por %p51, %p52
      %p54 = scmp.ne.s32.totalorder %s46, %s49
      %p55 = scmp.eq.s32.totalorder %s15, 0
      %p56 = por %p54, %p55
      %p57 = scmp.ne.s32.totalorder %s46, %s49
      %p58 = scmp.eq.s32.totalorder %s20, 1
      %p59 = por %p57, %p58
      %p60 = scmp.ne.s32.totalorder %s49, %s50
      %p61 = scmp.eq.s32.totalorder %s20, 0
      %p62 = por %p60, %p61
      %p63 = scmp.ne.s32.totalorder %s49, %s50
      %p64 = scmp.eq.s32.totalorder %s21, 1
      %p65 = por %p63, %p64
      %p67 = scmp.ne.s32.totalorder %s50, %s66
      %p68 = scmp.eq.s32.totalorder %s21, 0
      %p69 = por %p67, %p68
      %s70 = ssub.s32 %s15, %s22
      %p71 = scmp.eq.s32.totalorder %s70, 0
      %s73 = sadd.s32 %s72, 1
      %s74 = scalar_select %p71, %s72, %s73
      %p77 = pneg %p71
      %p78 = scmp.eq.s32.totalorder %s15, 1
      %p79 = por %p77, %p78
      %p80 = scmp.ne.s32.totalorder %s72, %s75
      %p81 = scmp.eq.s32.totalorder %s15, 0
      %p82 = por %p80, %p81
      %p83 = scmp.ne.s32.totalorder %s72, %s75
      %p84 = scmp.eq.s32.totalorder %s20, 1
      %p85 = por %p83, %p84
      %p86 = scmp.ne.s32.totalorder %s75, %s76
      %p87 = scmp.eq.s32.totalorder %s20, 0
      %p88 = por %p86, %p87
      %p89 = scmp.ne.s32.totalorder %s75, %s76
      %p90 = scmp.eq.s32.totalorder %s21, 1
      %p91 = por %p89, %p90
      %p93 = scmp.ne.s32.totalorder %s76, %s92
      %p94 = scmp.eq.s32.totalorder %s21, 0
      %p95 = por %p93, %p94
      %p96 = scmp.le.s32.totalorder 1, %s15
      %p97 = scmp.lt.s32.totalorder %s15, 3
      %p98 = pnand %p96, %p97
      %p99 = pneg %p98
      // Predicated region
      $region9: #{tpu_custom_call.1} parent=5 // pred_check
        _
      $region10: #{tpu_custom_call.1} parent=5 // pred_check_branch
        %101 = sbr.rel (%p98) target = $region12
      $region11: #{tpu_custom_call.1} parent=5 // pred_region
        %s102 = ssub.s32 %s15, 1
        // Predicated region
        $region13: #{tpu_custom_call.1} parent=11 // pred_check
          %p103 = pneg %p36
        $region14: #{tpu_custom_call.1} parent=11 // pred_check_branch
          %105 = sbr.rel (%p103) target = $region16
        $region15: #{tpu_custom_call.1} parent=11 // pred_region
          %107 = vsyncadd [#allocation5], 0
          %s109 = sshll.u32 %s0, 4
          %s110 = int_to_ptr.hbm [resolvable:$true] %s109
          %112 = dma.hbm_to_smem %s110, 16, [#allocation2], [#allocation5]
        $region16: #{tpu_custom_call.1} parent=11 // pred_fallthru
          _
      $region12: #{tpu_custom_call.1} parent=5 // pred_fallthru
        _
      %p113 = scmp.lt.s32.totalorder %s15, 2
      // Predicated region
      $region17: #{tpu_custom_call.1} parent=5 // pred_check
        %p114 = pneg %p113
      $region18: #{tpu_custom_call.1} parent=5 // pred_check_branch
        %116 = sbr.rel (%p114) target = $region20
      $region19: #{tpu_custom_call.1} parent=5 // pred_region
        // Predicated region
        $region21: #{tpu_custom_call.1} parent=19 // pred_check
          %p117 = pneg %p56
        $region22: #{tpu_custom_call.1} parent=19 // pred_check_branch
          %119 = sbr.rel (%p117) target = $region24
        $region23: #{tpu_custom_call.1} parent=19 // pred_region
          #allocation9 [shape = 'u32[6]{0}', space=smem, size = 0x18, scoped, tag = 'DMA stride descriptor']
          %s120 = sand.u32 %s46, 1
          %s121 = scalar_lea.sflag [#allocation3], %s120
          %s122 = sand.u32 %s46, 1
          %s123 = smul.addr %s122, 48
          %s124 = scalar_lea.vmem [#allocation6], %s123
          %s125 = smul.u32 2, %s15
          %127 = vsyncadd %s121, 0
          %s128 = smul.addr %s125, 8
          %s129 = scalar_lea.hbm %s1, %s128
          %s131 = sshll.u32 1, 14
          %s132 = sxor.u32 4294967295, %s131
          %s134 = sld [smem:[#allocation0]]
          %s135 = sadd.s32 2, %s134
          %s137 = sshll.u32 7, 26
          %s138 = sxor.u32 4294967295, %s137
          %s139 = sand.u32 0, %s138
          %s140 = sshll.u32 %s135, 26
          %s141 = sor.u32 %s139, %s140
          %s142 = sshll.u32 %s129, 4
          %s143 = int_to_ptr.hbm [resolvable:$true] %s142
          %s144 = sshll.u32 %s124, 4
          %s145 = int_to_ptr.vmem [resolvable:$true] %s144
          %151 = sst [smem:[#allocation9]] 512
          %s152 = scalar_lea.smem [#allocation9], 1
          %153 = sst [smem:[%s152]] 256
          %s154 = scalar_lea.smem [#allocation9], 2
          %155 = sst [smem:[%s154]] 2
          %s156 = scalar_lea.smem [#allocation9], 3
          %157 = sst [smem:[%s156]] 128
          %s158 = scalar_lea.smem [#allocation9], 4
          %159 = sst [smem:[%s158]] 128
          %s160 = scalar_lea.smem [#allocation9], 5
          %161 = sst [smem:[%s160]] 8
          %163 = dma.general %s143, 768, %s145, %s121, [#allocation8], [#allocation9], %s141, 0
        $region24: #{tpu_custom_call.1} parent=19 // pred_fallthru
          _
      $region20: #{tpu_custom_call.1} parent=5 // pred_fallthru
        _
      %p164 = scmp.le.s32.totalorder 1, %s15
      %p165 = scmp.lt.s32.totalorder %s15, 3
      %p166 = pnand %p164, %p165
      %p167 = pneg %p166
      // Predicated region
      $region25: #{tpu_custom_call.1} parent=5 // pred_check
        _
      $region26: #{tpu_custom_call.1} parent=5 // pred_check_branch
        %169 = sbr.rel (%p166) target = $region28
      $region27: #{tpu_custom_call.1} parent=5 // pred_region
        %s170 = ssub.s32 %s15, 1
        // Predicated region
        $region29: #{tpu_custom_call.1} parent=27 // pred_check
          %p171 = pneg %p36
        $region30: #{tpu_custom_call.1} parent=27 // pred_check_branch
          %173 = sbr.rel (%p171) target = $region32
        $region31: #{tpu_custom_call.1} parent=27 // pred_region
          %175 = dma.done [#allocation5], 16
        $region32: #{tpu_custom_call.1} parent=27 // pred_fallthru
          _
        %s176 = sand.u32 %s49, 1
        %s177 = scalar_lea.sflag [#allocation3], %s176
        %s178 = sand.u32 %s49, 1
        %s179 = smul.addr %s178, 48
        %s180 = scalar_lea.vmem [#allocation6], %s179
        // Predicated region
        $region33: #{tpu_custom_call.1} parent=27 // pred_check
          %p181 = pneg %p62
        $region34: #{tpu_custom_call.1} parent=27 // pred_check_branch
          %183 = sbr.rel (%p181) target = $region36
        $region35: #{tpu_custom_call.1} parent=27 // pred_region
          %185 = dma.done %s177, 768
        $region36: #{tpu_custom_call.1} parent=27 // pred_fallthru
          _
        %186 = sfence
        %p187 = pneg %p36
        %p188 = pneg %p33
        %s189 = sand.u32 %s49, 1
        %s190 = scalar_lea.sflag [#allocation3], %s189
        %s191 = sand.u32 %s49, 1
        %s192 = smul.addr %s191, 48
        %s193 = scalar_lea.vmem [#allocation6], %s192
        %p194 = pneg %p62
        %p195 = pneg %p59
        %p196 = pneg %p88
        %p197 = pneg %p85
        %s198 = sand.u32 %s75, 1
        %s199 = scalar_lea.sflag [#allocation4], %s198
        %s200 = sand.u32 %s75, 1
        %s201 = smul.addr %s200, 80
        %s202 = scalar_lea.vmem [#allocation7], %s201
        %s203 = smul.u32 2, %s20
        %s204 = smul.u32 2, %s20
        %v205 = vld [vmem:[%s180] sm:$0xff]
        %v206 = vld [vmem:[%s180 + $0x8] sm:$0xff]
        %s207 = scalar_lea.vmem %s180, 16 [#allocation6]
        %v208 = vld [vmem:[%s207] sm:$0xff]
        %v209 = vld [vmem:[%s207 + $0x8] sm:$0xff]
        %s210 = scalar_lea.vmem %s180, 32 [#allocation6]
        %v211 = vld [vmem:[%s210] sm:$0xff]
        %v212 = vld [vmem:[%s210 + $0x8] sm:$0xff]
        %s213 = sld [smem:[#allocation2]]
        %v214 = vstv %s213
        %v215 = vmul.f32 %v205, %v214
        %v216 = vmul.f32 %v206, %v214
        %s217 = sld [smem:[#allocation2 + $0xf]]
        %v218 = vstv %s217
        %v219 = vadd.f32 %v215, %v218
        %v220 = vadd.f32 %v216, %v218
        %s221 = sld [smem:[#allocation2 + $0x5]]
        %v222 = vstv %s221
        %v223 = vmul.f32 %v208, %v222
        %v224 = vmul.f32 %v209, %v222
        %v225 = vadd.f32 %v219, %v223
        %v226 = vadd.f32 %v220, %v224
        %s227 = sld [smem:[#allocation2 + $0xa]]
        %v228 = vstv %s227
        %v229 = vmul.f32 %v211, %v228
        %v230 = vmul.f32 %v212, %v228
        %v231 = vadd.f32 %v225, %v229
        %v232 = vadd.f32 %v226, %v230
        %233 = vst [vmem:[%s202] sm:$0xff] %v231
        %234 = vst [vmem:[%s202 + $0x8] sm:$0xff] %v232
        %s235 = sld [smem:[#allocation2 + $0x1]]
        %v236 = vstv %s235
        %v237 = vmul.f32 %v205, %v236
        %v238 = vmul.f32 %v206, %v236
        %s239 = sld [smem:[#allocation2 + $0x10]]
        %v240 = vstv %s239
        %v241 = vadd.f32 %v237, %v240
        %v242 = vadd.f32 %v238, %v240
        %s243 = sld [smem:[#allocation2 + $0x6]]
        %v244 = vstv %s243
        %v245 = vmul.f32 %v208, %v244
        %v246 = vmul.f32 %v209, %v244
        %v247 = vadd.f32 %v241, %v245
        %v248 = vadd.f32 %v242, %v246
        %s249 = sld [smem:[#allocation2 + $0xb]]
        %v250 = vstv %s249
        %v251 = vmul.f32 %v211, %v250
        %v252 = vmul.f32 %v212, %v250
        %v253 = vadd.f32 %v247, %v251
        %v254 = vadd.f32 %v248, %v252
        %s255 = scalar_lea.vmem %s202, 16 [#allocation7]
        %256 = vst [vmem:[%s255] sm:$0xff] %v253
        %257 = vst [vmem:[%s255 + $0x8] sm:$0xff] %v254
        %s258 = sld [smem:[#allocation2 + $0x2]]
        %v259 = vstv %s258
        %v260 = vmul.f32 %v205, %v259
        %v261 = vmul.f32 %v206, %v259
        %s262 = sld [smem:[#allocation2 + $0x11]]
        %v263 = vstv %s262
        %v264 = vadd.f32 %v260, %v263
        %v265 = vadd.f32 %v261, %v263
        %s266 = sld [smem:[#allocation2 + $0x7]]
        %v267 = vstv %s266
        %v268 = vmul.f32 %v208, %v267
        %v269 = vmul.f32 %v209, %v267
        %v270 = vadd.f32 %v264, %v268
        %v271 = vadd.f32 %v265, %v269
        %s272 = sld [smem:[#allocation2 + $0xc]]
        %v273 = vstv %s272
        %v274 = vmul.f32 %v211, %v273
        %v275 = vmul.f32 %v212, %v273
        %v276 = vadd.f32 %v270, %v274
        %v277 = vadd.f32 %v271, %v275
        %s278 = scalar_lea.vmem %s202, 32 [#allocation7]
        %279 = vst [vmem:[%s278] sm:$0xff] %v276
        %280 = vst [vmem:[%s278 + $0x8] sm:$0xff] %v277
        %s281 = sld [smem:[#allocation2 + $0x3]]
        %v282 = vstv %s281
        %v283 = vmul.f32 %v205, %v282
        %v284 = vmul.f32 %v206, %v282
        %s285 = sld [smem:[#allocation2 + $0x12]]
        %v286 = vstv %s285
        %v287 = vadd.f32 %v283, %v286
        %v288 = vadd.f32 %v284, %v286
        %s289 = sld [smem:[#allocation2 + $0x8]]
        %v290 = vstv %s289
        %v291 = vmul.f32 %v208, %v290
        %v292 = vmul.f32 %v209, %v290
        %v293 = vadd.f32 %v287, %v291
        %v294 = vadd.f32 %v288, %v292
        %s295 = sld [smem:[#allocation2 + $0xd]]
        %v296 = vstv %s295
        %v297 = vmul.f32 %v211, %v296
        %v298 = vmul.f32 %v212, %v296
        %v299 = vadd.f32 %v293, %v297
        %v300 = vadd.f32 %v294, %v298
        %s301 = scalar_lea.vmem %s202, 48 [#allocation7]
        %302 = vst [vmem:[%s301] sm:$0xff] %v299
        %303 = vst [vmem:[%s301 + $0x8] sm:$0xff] %v300
        %s304 = sld [smem:[#allocation2 + $0x4]]
        %v305 = vstv %s304
        %v306 = vmul.f32 %v205, %v305
        %v307 = vmul.f32 %v206, %v305
        %s308 = sld [smem:[#allocation2 + $0x13]]
        %v309 = vstv %s308
        %v310 = vadd.f32 %v306, %v309
        %v311 = vadd.f32 %v307, %v309
        %s312 = sld [smem:[#allocation2 + $0x9]]
        %v313 = vstv %s312
        %v314 = vmul.f32 %v208, %v313
        %v315 = vmul.f32 %v209, %v313
        %v316 = vadd.f32 %v310, %v314
        %v317 = vadd.f32 %v311, %v315
        %s318 = sld [smem:[#allocation2 + $0xe]]
        %v319 = vstv %s318
        %v320 = vmul.f32 %v211, %v319
        %v321 = vmul.f32 %v212, %v319
        %v322 = vadd.f32 %v316, %v320
        %v323 = vadd.f32 %v317, %v321
        %s324 = scalar_lea.vmem %s202, 64 [#allocation7]
        %325 = vst [vmem:[%s324] sm:$0xff] %v322
        %326 = vst [vmem:[%s324 + $0x8] sm:$0xff] %v323
        %s327 = sand.u32 %s75, 1
        %s328 = scalar_lea.sflag [#allocation4], %s327
        %s329 = sand.u32 %s75, 1
        %s330 = smul.addr %s329, 80
        %s331 = scalar_lea.vmem [#allocation7], %s330
        // Predicated region
        $region37: #{tpu_custom_call.1} parent=27 // pred_check
          %p332 = pneg %p85
        $region38: #{tpu_custom_call.1} parent=27 // pred_check_branch
          %334 = sbr.rel (%p332) target = $region40
        $region39: #{tpu_custom_call.1} parent=27 // pred_region
          #allocation11 [shape = 'u32[6]{0}', space=smem, size = 0x18, scoped, tag = 'DMA stride descriptor']
          %s335 = smul.u32 2, %s20
          %337 = vsyncadd %s328, 0
          %s338 = smul.addr %s335, 8
          %s339 = scalar_lea.hbm %s2, %s338
          %s341 = sshll.u32 1, 14
          %s342 = sxor.u32 4294967295, %s341
          %s345 = sshll.u32 7, 18
          %s346 = sxor.u32 4294967295, %s345
          %s347 = sand.u32 0, %s346
          %s349 = sor.u32 %s347, 0
          %s350 = sshll.u32 %s331, 4
          %s351 = int_to_ptr.vmem [resolvable:$true] %s350
          %s352 = sshll.u32 %s339, 4
          %s353 = int_to_ptr.hbm [resolvable:$true] %s352
          %359 = sst [smem:[#allocation11]] 256
          %s360 = scalar_lea.smem [#allocation11], 1
          %361 = sst [smem:[%s360]] 512
          %s362 = scalar_lea.smem [#allocation11], 2
          %363 = sst [smem:[%s362]] 2
          %s364 = scalar_lea.smem [#allocation11], 3
          %365 = sst [smem:[%s364]] 128
          %s366 = scalar_lea.smem [#allocation11], 4
          %367 = sst [smem:[%s366]] 128
          %s368 = scalar_lea.smem [#allocation11], 5
          %369 = sst [smem:[%s368]] 8
          %371 = dma.general %s351, 1280, %s353, %s328, [#allocation10], [#allocation11], %s349, 0
        $region40: #{tpu_custom_call.1} parent=27 // pred_fallthru
          _
      $region28: #{tpu_custom_call.1} parent=5 // pred_fallthru
        _
      %p372 = scmp.le.s32.totalorder 2, %s15
      // Predicated region
      $region41: #{tpu_custom_call.1} parent=5 // pred_check
        %p373 = pneg %p372
      $region42: #{tpu_custom_call.1} parent=5 // pred_check_branch
        %375 = sbr.rel (%p373) target = $region44
      $region43: #{tpu_custom_call.1} parent=5 // pred_region
        %s376 = ssub.s32 %s15, 2
        // Predicated region
        $region45: #{tpu_custom_call.1} parent=43 // pred_check
          %p377 = pneg %p91
        $region46: #{tpu_custom_call.1} parent=43 // pred_check_branch
          %379 = sbr.rel (%p377) target = $region48
        $region47: #{tpu_custom_call.1} parent=43 // pred_region
          %s380 = sand.u32 %s76, 1
          %s381 = scalar_lea.sflag [#allocation4], %s380
          %s382 = sand.u32 %s76, 1
          %s383 = smul.addr %s382, 80
          %s384 = scalar_lea.vmem [#allocation7], %s383
          %386 = dma.done %s381, 1280
        $region48: #{tpu_custom_call.1} parent=43 // pred_fallthru
          _
      $region44: #{tpu_custom_call.1} parent=5 // pred_fallthru
        _
    $region6: #{tpu_custom_call.1} parent=1 // loop_footer
      %s19 = sadd.s32 1, %s15
    $region7: #{tpu_custom_call.1} parent=1 // loop_footer_branch
      %14 = sbr.rel target = $region3
    $region8: #{tpu_custom_call.1} parent=1 // loop_exit
      _
    %387 = vsyncpa [#allocation3], 1
    %s388 = scalar_lea.sflag [#allocation3], 1
    %389 = vsyncpa %s388, 1
    %390 = vsyncpa [#allocation4], 1
    %s391 = scalar_lea.sflag [#allocation4], 1
    %392 = vsyncpa %s391, 1
    %393 = vsyncpa [#allocation5], 1
    %s394 = scalar_lea.sflag [#allocation5], 1
    %395 = vsyncpa %s394, 1

</llo_original>
